<compile_context>
chip_gen: v7x
topology: tpu7x:2x2x1
jax: 0.10.0
libtpu: 0.0.40
codegen_flags: <defaults>
</compile_context>

<pallas_src>
import functools
import math

import jax
import jax.numpy as jnp
from jax.experimental import pallas as pl
from jax.experimental.pallas import tpu as pltpu

_LOG_EPS_PRED = math.log(1e-7)      # floor for log(pred) after clip(1e-7, 1)
_EPS_OH = 1e-4                      # one-hot clamp floor
_NEG_LOG_EPS_OH = -math.log(1e-4)   # -log(1e-4)


def _sce_kernel(pred_ref, labels_ref, partial_ref, acc_ref, *,
                alpha, beta, n_rows, block_n, tiles_per_core):
    # pred_ref:    (block_n, C) logits in VMEM (native dtype, cast to f32 here)
    # labels_ref:  (block_n, 1) int32 labels in VMEM
    # partial_ref: (1, 8, 128) f32 per-core partial-sum output block in VMEM
    # acc_ref:     (1,) f32 SMEM scratch accumulator (per core, persists
    #              across the inner "arbitrary" grid axis)
    core = pl.program_id(0)
    step = pl.program_id(1)

    @pl.when(step == 0)
    def _init():
        acc_ref[0] = jnp.float32(0.0)

    logits = pred_ref[...].astype(jnp.float32)          # (TN, C)
    labels = labels_ref[...]                            # (TN, 1) int32
    tn, nc = logits.shape

    # Row-validity mask. Tail / out-of-range tiles contain Pallas-padded
    # (undefined) rows; everything below is per-row, and the jnp.where select
    # at the end drops any NaN/garbage from those rows before accumulation.
    # Do NOT reorder the reduction before this mask.
    blk = core * tiles_per_core + step                  # unclamped block index
    row_ids = blk * block_n + jax.lax.broadcasted_iota(jnp.int32, (tn, 1), 0)
    row_valid = row_ids < n_rows                        # (TN, 1) bool

    # Log-softmax pieces (one exp per element, one log per row).
    m = jnp.max(logits, axis=1, keepdims=True)          # (TN, 1)   XLU
    shifted = logits - m                                # (TN, C)
    e = jnp.exp(shifted)                                # (TN, C)   EUP
    denom = jnp.sum(e, axis=1, keepdims=True)           # (TN, 1)   XLU
    lse = jnp.log(denom)                                # (TN, 1)   one log/row

    # Per-row reciprocal on the EUP slot + one Newton step (cheap: (TN, 1)).
    r = pl.reciprocal(denom, approx=True)
    r = r * (2.0 - denom * r)

    # p = clip(softmax, 1e-7, 1): the upper clip is dropped (softmax <= 1;
    # post-Newton overshoot ~1e-14, well inside the 1e-4 tolerance).
    p = jnp.maximum(e * r, jnp.float32(1e-7))           # (TN, C)

    # log(clip(softmax, 1e-7, 1)) == max(log_softmax, log(1e-7)); log_softmax
    # <= 0 so the upper clip is automatic. No elementwise log.
    logp = jnp.maximum(shifted - lse, jnp.float32(_LOG_EPS_PRED))

    # Boolean label mask (no float one-hot materialized).
    class_ids = jax.lax.broadcasted_iota(jnp.int32, (tn, nc), 1)
    label_mask = class_ids == labels                    # (TN, C) bool

    # Fused reductions (2 instead of 4):
    # ce_row  = -sum_c clip(onehot,1e-4,1) * log(p)
    #         = -sum_c logp * where(label, 1, 1e-4)
    # rce_row = -sum_c p * log(clip(onehot,1e-4,1))
    #         = -log(1e-4) * sum_{c != label} p
    w = jnp.where(label_mask, jnp.float32(1.0), jnp.float32(_EPS_OH))
    ce_rows = -jnp.sum(logp * w, axis=1, keepdims=True)              # XLU
    off_p = jnp.sum(jnp.where(label_mask, 0.0, p), axis=1, keepdims=True)  # XLU
    rce_rows = jnp.float32(_NEG_LOG_EPS_OH) * off_p

    tile_rows = jnp.where(row_valid, alpha * ce_rows + beta * rce_rows, 0.0)
    acc_ref[0] += jnp.sum(tile_rows)

    @pl.when(step == pl.num_programs(1) - 1)
    def _finalize():
        # One (8, 128)-aligned block per core; lane 0 of row 0 carries the
        # partial sum (the rest is just the broadcast value).
        partial_ref[...] = jnp.full(partial_ref.shape, acc_ref[0],
                                    dtype=jnp.float32)


def _round_up(x, m):
    return ((x + m - 1) // m) * m


def _pick_block_n(n, c, itemsize, sublane):
    """Largest sublane-aligned row tile whose real VMEM footprint fits ~20 MiB.

    Footprint per row of tile (bytes):
      2 * c_lanes * itemsize   streamed pred, double-buffered, lane-padded
      2 * 128 * 4              int32 labels block, double-buffered, lane-padded
      5 * c_lanes * 4          f32 intermediates (cast logits, shifted/e, p,
                               logp, select temp)
    """
    c_lanes = _round_up(max(c, 1), 128)
    per_row = 2 * c_lanes * itemsize + 2 * 128 * 4 + 5 * c_lanes * 4
    budget = 20 * 1024 * 1024
    bn = budget // per_row
    bn = max(sublane, min(2048, bn))
    bn = min(bn, _round_up(n, sublane))
    bn = max(sublane, (bn // sublane) * sublane)
    return bn


def sce_loss(pred, labels, *, alpha, beta, num_classes,
             block_n=None, num_cores=2):
    """pred: (N, C) logits (any float dtype); labels: (N,) ints. Scalar f32.

    block_n: rows per tile (auto-sized against a ~20 MiB VMEM budget if None).
    num_cores: leading "parallel" grid axis; 2 uses both TensorCores on v7x
    and is a harmless sequential loop on single-core chips (v5e/v6e).
    """
    n, c = pred.shape
    assert c == num_classes
    labels2d = labels.astype(jnp.int32).reshape(n, 1)

    itemsize = jnp.dtype(pred.dtype).itemsize
    sublane = {1: 32, 2: 16}.get(itemsize, 8)   # native sublane tile per dtype

    if block_n is None:
        block_n = _pick_block_n(n, c, itemsize, sublane)
    block_n = max(sublane, min(int(block_n), _round_up(n, sublane)))
    block_n = _round_up(block_n, sublane)

    total_tiles = (n + block_n - 1) // block_n
    num_cores = max(1, int(num_cores))
    tiles_per_core = (total_tiles + num_cores - 1) // num_cores
    last_blk = total_tiles - 1

    def row_block(ci, ii):
        # Clamp so the DMA stays in-bounds; the kernel masks the extra rows
        # (it uses the *unclamped* block index for the row-validity test).
        return jnp.minimum(ci * tiles_per_core + ii, last_blk)

    kernel = functools.partial(
        _sce_kernel,
        alpha=float(alpha),
        beta=float(beta),
        n_rows=n,
        block_n=block_n,
        tiles_per_core=tiles_per_core,
    )

    cost = pl.CostEstimate(
        flops=10 * n * c,
        transcendentals=n * c + n,            # exp per element + log per row
        bytes_accessed=n * c * itemsize + n * 4 + num_cores * 8 * 128 * 4,
    )

    partials = pl.pallas_call(
        kernel,
        out_shape=jax.ShapeDtypeStruct((num_cores, 8, 128), jnp.float32),
        grid=(num_cores, tiles_per_core),
        in_specs=[
            pl.BlockSpec((block_n, c), lambda ci, ii: (row_block(ci, ii), 0)),
            pl.BlockSpec((block_n, 1), lambda ci, ii: (row_block(ci, ii), 0)),
        ],
        out_specs=pl.BlockSpec((1, 8, 128), lambda ci, ii: (ci, 0, 0)),
        scratch_shapes=[pltpu.SMEM((1,), jnp.float32)],
        compiler_params=pltpu.CompilerParams(
            dimension_semantics=("parallel", "arbitrary"),
            vmem_limit_bytes=32 * 1024 * 1024,
        ),
        cost_estimate=cost,
    )(pred, labels2d)   # pred streamed in native dtype; cast inside the kernel

    # Tiny final combine of the per-core partial sums, then the /N mean.
    return jnp.sum(partials[:, 0, 0]) * jnp.float32(1.0 / n)


def _reference_sce(pred, labels, alpha, beta, num_classes):
    p = jax.nn.softmax(pred.astype(jnp.float32), axis=1)
    p = jnp.clip(p, 1e-7, 1.0)
    oh = jnp.clip(jax.nn.one_hot(labels, num_classes, dtype=jnp.float32),
                  1e-4, 1.0)
    ce = jnp.mean(-jnp.sum(oh * jnp.log(p), axis=1))
    rce = jnp.mean(-jnp.sum(p * jnp.log(oh), axis=1))
    return alpha * ce + beta * rce


if __name__ == "__main__":
    key = jax.random.PRNGKey(0)
    k_pred, k_lbl = jax.random.split(key)

    batch = 200          # block_n=64, 2 cores -> tiles (0,1)/(2,3), masked tail
    num_classes = 10
    alpha, beta = 0.5, 1.0

    pred = jax.random.normal(
        k_pred, (batch, num_classes), dtype=jnp.float32
    ).astype(jnp.bfloat16)   # native bf16 streamed into the kernel
    labels = jax.random.randint(k_lbl, (batch,), 0, num_classes, dtype=jnp.int32)

    loss = sce_loss(pred, labels, alpha=alpha, beta=beta,
                    num_classes=num_classes, block_n=64, num_cores=2)
    loss = jax.block_until_ready(loss)

    ref = _reference_sce(pred, labels, alpha, beta, num_classes)
    assert jnp.allclose(loss, ref, rtol=1e-4, atol=1e-4), (loss, ref)

    print("KERNEL_OK")
</pallas_src>

<mosaic_0001>
module attributes {stable_mosaic.version = 11 : i64} {
  func.func @_sce_kernel(%arg0: i32, %arg1: i32, %arg2: memref<64x10xbf16, #tpu.memory_space<vmem>>, %arg3: memref<64x1xi32, #tpu.memory_space<vmem>>, %arg4: memref<1x8x128xf32, #tpu.memory_space<vmem>>, %arg5: memref<1xf32, #tpu.memory_space<smem>>) attributes {dimension_semantics = [#tpu.dimension_semantics<parallel>, #tpu.dimension_semantics<arbitrary>], iteration_bounds = array<i64: 2, 2>, scalar_prefetch = 0 : i64, scratch_operands = 1 : i64, tpu.core_type = #tpu.core_type<tc>, window_params = [{transform_indices = @transform_0, window_bounds = array<i64: 64, 10>}, {transform_indices = @transform_1, window_bounds = array<i64: 64, 1>}, {transform_indices = @transform_2, window_bounds = array<i64: 1, 8, 128>}]} {
    %c0_i32 = arith.constant 0 : i32
    %0 = arith.cmpi eq, %arg1, %c0_i32 : i32
    %1 = arith.extui %0 : i1 to i32
    %c0_i32_0 = arith.constant 0 : i32
    %2 = arith.cmpi ne, %1, %c0_i32_0 : i32
    scf.if %2 {
      %cst_22 = arith.constant 0.000000e+00 : f32
      %c0_23 = arith.constant 0 : index
      %69 = memref.load %arg5[%c0_23] : memref<1xf32, #tpu.memory_space<smem>>
      memref.store %cst_22, %arg5[%c0_23] : memref<1xf32, #tpu.memory_space<smem>>
    } else {
    }
    %c0 = arith.constant 0 : index
    %c0_1 = arith.constant 0 : index
    %3 = vector.load %arg2[%c0, %c0_1] : memref<64x10xbf16, #tpu.memory_space<vmem>>, vector<64x10xbf16>
    %4 = arith.extf %3 : vector<64x10xbf16> to vector<64x10xf32>
    %c0_2 = arith.constant 0 : index
    %c0_3 = arith.constant 0 : index
    %5 = vector.load %arg3[%c0_2, %c0_3] : memref<64x1xi32, #tpu.memory_space<vmem>>, vector<64x1xi32>
    %c2_i32 = arith.constant 2 : i32
    %6 = arith.muli %arg0, %c2_i32 : i32
    %7 = arith.addi %6, %arg1 : i32
    %c64_i32 = arith.constant 64 : i32
    %8 = arith.muli %7, %c64_i32 : i32
    %9 = tpu.iota {dimensions = array<i32: 0>} : vector<64x1xi32>
    %10 = vector.broadcast %8 : i32 to vector<64x1xi32>
    %11 = arith.addi %10, %9 : vector<64x1xi32>
    %c200_i32 = arith.constant 200 : i32
    %12 = vector.broadcast %c200_i32 : i32 to vector<64x1xi32>
    %13 = arith.cmpi slt, %11, %12 : vector<64x1xi32>
    %cst = arith.constant dense<0xFF800000> : vector<64xf32>
    %14 = vector.multi_reduction <maximumf>, %4, %cst [1] : vector<64x10xf32> to vector<64xf32>
    %15 = vector.shape_cast %14 : vector<64xf32> to vector<64x1xf32>
    %16 = vector.broadcast %15 : vector<64x1xf32> to vector<64x10xf32>
    %17 = arith.subf %4, %16 : vector<64x10xf32>
    %18 = math.exp %17 : vector<64x10xf32>
    %cst_4 = arith.constant dense<0.000000e+00> : vector<64xf32>
    %19 = vector.multi_reduction <add>, %18, %cst_4 [1] : vector<64x10xf32> to vector<64xf32>
    %20 = vector.shape_cast %19 : vector<64xf32> to vector<64x1xf32>
    %21 = math.log %20 : vector<64x1xf32>
    %22 = tpu.reciprocal %20 {approx = true} : vector<64x1xf32> -> vector<64x1xf32>
    %23 = arith.mulf %20, %22 : vector<64x1xf32>
    %cst_5 = arith.constant 2.000000e+00 : f32
    %24 = vector.broadcast %cst_5 : f32 to vector<64x1xf32>
    %25 = arith.subf %24, %23 : vector<64x1xf32>
    %26 = arith.mulf %22, %25 : vector<64x1xf32>
    %27 = vector.broadcast %26 : vector<64x1xf32> to vector<64x10xf32>
    %28 = arith.mulf %18, %27 : vector<64x10xf32>
    %cst_6 = arith.constant 1.000000e-07 : f32
    %29 = vector.broadcast %cst_6 : f32 to vector<64x10xf32>
    %30 = arith.maximumf %28, %29 : vector<64x10xf32>
    %31 = vector.broadcast %21 : vector<64x1xf32> to vector<64x10xf32>
    %32 = arith.subf %17, %31 : vector<64x10xf32>
    %cst_7 = arith.constant -16.1180954 : f32
    %33 = vector.broadcast %cst_7 : f32 to vector<64x10xf32>
    %34 = arith.maximumf %32, %33 : vector<64x10xf32>
    %35 = tpu.iota {dimensions = array<i32: 1>} : vector<64x10xi32>
    %36 = vector.broadcast %5 : vector<64x1xi32> to vector<64x10xi32>
    %37 = arith.cmpi eq, %35, %36 : vector<64x10xi32>
    %cst_8 = arith.constant 1.000000e+00 : f32
    %cst_9 = arith.constant 9.99999974E-5 : f32
    %38 = vector.broadcast %cst_8 : f32 to vector<64x10xf32>
    %39 = vector.broadcast %cst_9 : f32 to vector<64x10xf32>
    %40 = arith.select %37, %38, %39 : vector<64x10xi1>, vector<64x10xf32>
    %41 = arith.mulf %34, %40 : vector<64x10xf32>
    %cst_10 = arith.constant dense<0.000000e+00> : vector<64xf32>
    %42 = vector.multi_reduction <add>, %41, %cst_10 [1] : vector<64x10xf32> to vector<64xf32>
    %43 = vector.shape_cast %42 : vector<64xf32> to vector<64x1xf32>
    %cst_11 = arith.constant 0.000000e+00 : f32
    %44 = vector.broadcast %cst_11 : f32 to vector<64x1xf32>
    %45 = arith.subf %44, %43 : vector<64x1xf32>
    %cst_12 = arith.constant 0.000000e+00 : f32
    %46 = vector.broadcast %cst_12 : f32 to vector<64x10xf32>
    %47 = arith.select %37, %46, %30 : vector<64x10xi1>, vector<64x10xf32>
    %cst_13 = arith.constant dense<0.000000e+00> : vector<64xf32>
    %48 = vector.multi_reduction <add>, %47, %cst_13 [1] : vector<64x10xf32> to vector<64xf32>
    %49 = vector.shape_cast %48 : vector<64xf32> to vector<64x1xf32>
    %cst_14 = arith.constant 9.21034049 : f32
    %50 = vector.broadcast %cst_14 : f32 to vector<64x1xf32>
    %51 = arith.mulf %50, %49 : vector<64x1xf32>
    %cst_15 = arith.constant 5.000000e-01 : f32
    %52 = vector.broadcast %cst_15 : f32 to vector<64x1xf32>
    %53 = arith.mulf %52, %45 : vector<64x1xf32>
    %cst_16 = arith.constant 1.000000e+00 : f32
    %54 = vector.broadcast %cst_16 : f32 to vector<64x1xf32>
    %55 = arith.mulf %54, %51 : vector<64x1xf32>
    %56 = arith.addf %53, %55 : vector<64x1xf32>
    %cst_17 = arith.constant 0.000000e+00 : f32
    %57 = vector.broadcast %cst_17 : f32 to vector<64x1xf32>
    %58 = arith.select %13, %56, %57 : vector<64x1xi1>, vector<64x1xf32>
    %c0_18 = arith.constant 0 : index
    %59 = memref.load %arg5[%c0_18] : memref<1xf32, #tpu.memory_space<smem>>
    %60 = vector.shape_cast %58 : vector<64x1xf32> to vector<1x64x1xf32>
    %cst_19 = arith.constant dense<0.000000e+00> : vector<1xf32>
    %61 = vector.multi_reduction <add>, %60, %cst_19 [1, 2] : vector<1x64x1xf32> to vector<1xf32>
    %62 = vector.shape_cast %61 : vector<1xf32> to vector<1x1x1xf32>
    %63 = vector.extract %62[0, 0, 0] : f32 from vector<1x1x1xf32>
    %64 = arith.addf %59, %63 : f32
    %c0_20 = arith.constant 0 : index
    %65 = memref.load %arg5[%c0_20] : memref<1xf32, #tpu.memory_space<smem>>
    memref.store %64, %arg5[%c0_20] : memref<1xf32, #tpu.memory_space<smem>>
    %c1_i32 = arith.constant 1 : i32
    %66 = arith.cmpi eq, %arg1, %c1_i32 : i32
    %67 = arith.extui %66 : i1 to i32
    %c0_i32_21 = arith.constant 0 : i32
    %68 = arith.cmpi ne, %67, %c0_i32_21 : i32
    scf.if %68 {
      %c0_22 = arith.constant 0 : index
      %69 = memref.load %arg5[%c0_22] : memref<1xf32, #tpu.memory_space<smem>>
      %70 = vector.broadcast %69 : f32 to vector<1x8x128xf32>
      %c0_23 = arith.constant 0 : index
      %c0_24 = arith.constant 0 : index
      %c0_25 = arith.constant 0 : index
      %71 = vector.load %arg4[%c0_23, %c0_24, %c0_25] : memref<1x8x128xf32, #tpu.memory_space<vmem>>, vector<1x8x128xf32>
      tpu.vector_store %arg4[%c0_23, %c0_24, %c0_25], %70 {strides = array<i32>} : memref<1x8x128xf32, #tpu.memory_space<vmem>>, vector<1x8x128xf32>,
    } else {
    }
    return
  }
  func.func @transform_0(%arg0: i32, %arg1: i32) -> (i32, i32) {
    %c2_i32 = arith.constant 2 : i32
    %0 = arith.muli %arg0, %c2_i32 : i32
    %1 = arith.addi %0, %arg1 : i32
    %c3_i32 = arith.constant 3 : i32
    %2 = arith.minsi %1, %c3_i32 : i32
    %c0_i32 = arith.constant 0 : i32
    %c0_i32_0 = arith.constant 0 : i32
    return %2, %c0_i32 : i32, i32
  }
  func.func @transform_1(%arg0: i32, %arg1: i32) -> (i32, i32) {
    %c2_i32 = arith.constant 2 : i32
    %0 = arith.muli %arg0, %c2_i32 : i32
    %1 = arith.addi %0, %arg1 : i32
    %c3_i32 = arith.constant 3 : i32
    %2 = arith.minsi %1, %c3_i32 : i32
    %c0_i32 = arith.constant 0 : i32
    %c0_i32_0 = arith.constant 0 : i32
    return %2, %c0_i32 : i32, i32
  }
  func.func @transform_2(%arg0: i32, %arg1: i32) -> (i32, i32, i32) {
    %c0_i32 = arith.constant 0 : i32
    %c0_i32_0 = arith.constant 0 : i32
    %c0_i32_1 = arith.constant 0 : i32
    return %arg0, %c0_i32, %c0_i32_0 : i32, i32, i32
  }
}

</mosaic_0001>

<llo_original>
// kernel: tpu_custom_call.1
$region0: #{tpu_custom_call.1}
  #allocation0 [shape = 'u32[]', space=smem, size = 0x4, offset = 0x4, fixed_abs, tag = 'smem constant byte address 0x4 - core index']
  #allocation1 [shape = 'u32[144,128]{1,0:T(1,128)}', space=vmem, size = 0x12000, scoped, tag = 'internal scratch']
  #allocation2 [shape = 'f32[1]{0:T(128)}', space=smem, size = 0x200, scoped, tag = 'scratch operand']
  %s0 = inlined_call_operand.vmem [shape: bf16[200,10], index: 0, kind: input, shape index: {}]
  %s1 = inlined_call_operand.vmem [shape: s32[200,1], index: 1, kind: input, shape index: {}]
  %s2 = inlined_call_operand.hbm [shape: f32[2,8,128], index: 2, kind: output, shape index: {}]
  %s3 = sld [smem:[#allocation0]]
  $region49: #{tpu_custom_call.1} parent=0
    _
  %s5 = ssub.s32 1, %s3
  %s6 = scalar_select 0, %s5, %s3
  $region1: #{tpu_custom_call.1} parent=0
    #allocation3 [shape = 'u8[8192]{0}', space=vmem, size = 0x2000, scoped, tag = 'output window, operand 0']
    #allocation4 [shape = 's32[2]{0}', space=sflag, size = 0x8, scoped, tag = 'scoped memory for tpu_custom_call.1']
    %7 = vsyncpa [#allocation4], 0
    %s8 = scalar_lea.sflag [#allocation4], 1
    %9 = vsyncpa %s8, 0
    loop: start=0, step=1, limit=6
    $region2: #{tpu_custom_call.1} parent=1 // loop_pre_header
      _
    $region3: #{tpu_custom_call.1} parent=1 // loop_header
      %s11 = sphi 0, %s15
      %p12 = scmp.ge.s32.totalorder %s11, 6
      %s18 = sphi 0, %s30
      %s19 = sphi 0, %s26
      %s20 = sphi 0, %s18
      %s21 = sphi 0, %s19
      %s22 = sphi 0, %s20
      %s23 = sphi 0, %s21
      %s41 = sphi 0, %s43
      %s44 = sphi 0, %s41
      %s45 = sphi 0, %s44
      %s61 = sphi 0, %s45
      %s75 = sphi 0, %s77
      %s78 = sphi 0, %s75
      %s79 = sphi 0, %s78
      %s95 = sphi 0, %s79
      %s101 = sphi 0, %s103
      %s104 = sphi 0, %s101
      %s105 = sphi 0, %s104
      %s121 = sphi 0, %s105
    $region4: #{tpu_custom_call.1} parent=1 // loop_header_branch
      %14 = sbr.rel (%p12) target = $region8
    $region5: #{tpu_custom_call.1} parent=1 // loop_body
      %s16 = ssub.s32 %s11, 1
      %s17 = ssub.s32 %s11, 2
      %s24 = sadd.s32 1, %s19
      %p25 = scmp.ge.s32.totalorder %s24, 2
      %s26 = scalar_select %p25, 0, %s24
      %s27 = sadd.s32 1, %s18
      %s28 = scalar_select %p25, %s27, %s18
      %p29 = scmp.ge.s32.totalorder %s28, 2
      %s30 = scalar_select %p29, 0, %s28
      %s31 = smul.u32 %s18, 2
      %s32 = sadd.s32 %s31, %s19
      %p33 = scmp.lt.s32.totalorder %s32, 3
      %s34 = scalar_select %p33, %s32, 3
      %s35 = smul.u32 %s30, 2
      %s36 = sadd.s32 %s35, %s26
      %p37 = scmp.lt.s32.totalorder %s36, 3
      %s38 = scalar_select %p37, %s36, 3
      %s39 = ssub.s32 %s34, %s38
      %p40 = scmp.eq.s32.totalorder %s39, 0
      %s42 = sadd.s32 %s41, 1
      %s43 = scalar_select %p40, %s41, %s42
      %p46 = pneg %p40
      %p47 = scmp.eq.s32.totalorder %s11, 3
      %p48 = por %p46, %p47
      %p49 = scmp.ne.s32.totalorder %s41, %s44
      %p50 = scmp.eq.s32.totalorder %s11, 0
      %p51 = por %p49, %p50
      %p52 = scmp.ne.s32.totalorder %s41, %s44
      %p53 = scmp.eq.s32.totalorder %s16, 3
      %p54 = por %p52, %p53
      %p55 = scmp.ne.s32.totalorder %s44, %s45
      %p56 = scmp.eq.s32.totalorder %s16, 0
      %p57 = por %p55, %p56
      %p58 = scmp.ne.s32.totalorder %s44, %s45
      %p59 = scmp.eq.s32.totalorder %s17, 3
      %p60 = por %p58, %p59
      %p62 = scmp.ne.s32.totalorder %s45, %s61
      %p63 = scmp.eq.s32.totalorder %s17, 0
      %p64 = por %p62, %p63
      %s65 = smul.u32 %s18, 2
      %s66 = sadd.s32 %s65, %s19
      %p67 = scmp.lt.s32.totalorder %s66, 3
      %s68 = scalar_select %p67, %s66, 3
      %s69 = smul.u32 %s30, 2
      %s70 = sadd.s32 %s69, %s26
      %p71 = scmp.lt.s32.totalorder %s70, 3
      %s72 = scalar_select %p71, %s70, 3
      %s73 = ssub.s32 %s68, %s72
      %p74 = scmp.eq.s32.totalorder %s73, 0
      %s76 = sadd.s32 %s75, 1
      %s77 = scalar_select %p74, %s75, %s76
      %p80 = pneg %p74
      %p81 = scmp.eq.s32.totalorder %s11, 3
      %p82 = por %p80, %p81
      %p83 = scmp.ne.s32.totalorder %s75, %s78
      %p84 = scmp.eq.s32.totalorder %s11, 0
      %p85 = por %p83, %p84
      %p86 = scmp.ne.s32.totalorder %s75, %s78
      %p87 = scmp.eq.s32.totalorder %s16, 3
      %p88 = por %p86, %p87
      %p89 = scmp.ne.s32.totalorder %s78, %s79
      %p90 = scmp.eq.s32.totalorder %s16, 0
      %p91 = por %p89, %p90
      %p92 = scmp.ne.s32.totalorder %s78, %s79
      %p93 = scmp.eq.s32.totalorder %s17, 3
      %p94 = por %p92, %p93
      %p96 = scmp.ne.s32.totalorder %s79, %s95
      %p97 = scmp.eq.s32.totalorder %s17, 0
      %p98 = por %p96, %p97
      %s99 = ssub.s32 %s18, %s30
      %p100 = scmp.eq.s32.totalorder %s99, 0
      %s102 = sadd.s32 %s101, 1
      %s103 = scalar_select %p100, %s101, %s102
      %p106 = pneg %p100
      %p107 = scmp.eq.s32.totalorder %s11, 3
      %p108 = por %p106, %p107
      %p109 = scmp.ne.s32.totalorder %s101, %s104
      %p110 = scmp.eq.s32.totalorder %s11, 0
      %p111 = por %p109, %p110
      %p112 = scmp.ne.s32.totalorder %s101, %s104
      %p113 = scmp.eq.s32.totalorder %s16, 3
      %p114 = por %p112, %p113
      %p115 = scmp.ne.s32.totalorder %s104, %s105
      %p116 = scmp.eq.s32.totalorder %s16, 0
      %p117 = por %p115, %p116
      %p118 = scmp.ne.s32.totalorder %s104, %s105
      %p119 = scmp.eq.s32.totalorder %s17, 3
      %p120 = por %p118, %p119
      %p122 = scmp.ne.s32.totalorder %s105, %s121
      %p123 = scmp.eq.s32.totalorder %s17, 0
      %p124 = por %p122, %p123
      %p125 = scmp.le.s32.totalorder 1, %s11
      %p126 = scmp.lt.s32.totalorder %s11, 5
      %p127 = pnand %p125, %p126
      %p128 = pneg %p127
      // Predicated region
      $region9: #{tpu_custom_call.1} parent=5 // pred_check
        _
      $region10: #{tpu_custom_call.1} parent=5 // pred_check_branch
        %130 = sbr.rel (%p127) target = $region12
      $region11: #{tpu_custom_call.1} parent=5 // pred_region
        %s131 = ssub.s32 %s11, 1
      $region12: #{tpu_custom_call.1} parent=5 // pred_fallthru
        _
      %p132 = scmp.lt.s32.totalorder %s11, 4
      // Predicated region
      $region13: #{tpu_custom_call.1} parent=5 // pred_check
        %p133 = pneg %p132
      $region14: #{tpu_custom_call.1} parent=5 // pred_check_branch
        %135 = sbr.rel (%p133) target = $region16
      $region15: #{tpu_custom_call.1} parent=5 // pred_region
        // Predicated region
        $region17: #{tpu_custom_call.1} parent=15 // pred_check
          %p136 = pneg %p51
        $region18: #{tpu_custom_call.1} parent=15 // pred_check_branch
          %138 = sbr.rel (%p136) target = $region20
        $region19: #{tpu_custom_call.1} parent=15 // pred_region
          %s139 = smul.u32 %s18, 2
          %s140 = sadd.s32 %s139, %s19
          %p141 = scmp.lt.s32.totalorder %s140, 3
          %s142 = scalar_select %p141, %s140, 3
          %s143 = smul.u32 8, %s142
          %s144 = ssub.s32 25, %s143
          %p145 = scmp.lt.s32.totalorder %s144, 8
          %s146 = scalar_select %p145, %s144, 8
          %s147 = smul.u32 64, %s146
          %p148 = scmp.lt.s32.totalorder %s143, 24
          %s149 = scalar_select %p148, %s143, 24
          %s150 = smul.addr %s149, 4
          %s151 = scalar_lea.vmem %s0, %s150
          %s152 = smul.u32 %s18, 2
          %s153 = sadd.s32 %s152, %s19
          %p154 = scmp.lt.s32.totalorder %s153, 3
          %s155 = scalar_select %p154, %s153, 3
          %s156 = smul.u32 8, %s155
          %s157 = ssub.s32 25, %s156
          %p158 = scmp.lt.s32.totalorder %s157, 8
          %s159 = scalar_select %p158, %s157, 8
          %s160 = smul.u32 64, %s159
        $region20: #{tpu_custom_call.1} parent=15 // pred_fallthru
          _
        // Predicated region
        $region21: #{tpu_custom_call.1} parent=15 // pred_check
          %p161 = pneg %p85
        $region22: #{tpu_custom_call.1} parent=15 // pred_check_branch
          %163 = sbr.rel (%p161) target = $region24
        $region23: #{tpu_custom_call.1} parent=15 // pred_region
          %s164 = smul.u32 %s18, 2
          %s165 = sadd.s32 %s164, %s19
          %p166 = scmp.lt.s32.totalorder %s165, 3
          %s167 = scalar_select %p166, %s165, 3
          %s168 = smul.u32 8, %s167
          %s169 = ssub.s32 25, %s168
          %p170 = scmp.lt.s32.totalorder %s169, 8
          %s171 = scalar_select %p170, %s169, 8
          %s172 = smul.u32 128, %s171
          %p173 = scmp.lt.s32.totalorder %s168, 24
          %s174 = scalar_select %p173, %s168, 24
          %s175 = smul.addr %s174, 8
          %s176 = scalar_lea.vmem %s1, %s175
          %s177 = smul.u32 %s18, 2
          %s178 = sadd.s32 %s177, %s19
          %p179 = scmp.lt.s32.totalorder %s178, 3
          %s180 = scalar_select %p179, %s178, 3
          %s181 = smul.u32 8, %s180
          %s182 = ssub.s32 25, %s181
          %p183 = scmp.lt.s32.totalorder %s182, 8
          %s184 = scalar_select %p183, %s182, 8
          %s185 = smul.u32 128, %s184
        $region24: #{tpu_custom_call.1} parent=15 // pred_fallthru
          _
      $region16: #{tpu_custom_call.1} parent=5 // pred_fallthru
        _
      %p186 = scmp.le.s32.totalorder 1, %s11
      %p187 = scmp.lt.s32.totalorder %s11, 5
      %p188 = pnand %p186, %p187
      %p189 = pneg %p188
      // Predicated region
      $region25: #{tpu_custom_call.1} parent=5 // pred_check
        _
      $region26: #{tpu_custom_call.1} parent=5 // pred_check_branch
        %191 = sbr.rel (%p188) target = $region28
      $region27: #{tpu_custom_call.1} parent=5 // pred_region
        %s192 = ssub.s32 %s11, 1
        %s193 = smul.u32 %s20, 2
        %s194 = sadd.s32 %s193, %s21
        %p195 = scmp.lt.s32.totalorder %s194, 3
        %s196 = scalar_select %p195, %s194, 3
        %s197 = smul.u32 8, %s196
        %s198 = ssub.s32 25, %s197
        %p199 = scmp.lt.s32.totalorder %s198, 8
        %s200 = scalar_select %p199, %s198, 8
        %s201 = smul.u32 64, %s200
        %p202 = scmp.lt.s32.totalorder %s197, 24
        %s203 = scalar_select %p202, %s197, 24
        %s204 = smul.addr %s203, 4
        %s205 = scalar_lea.vmem %s0, %s204
        %p206 = pneg %p57
        %p207 = pneg %p54
        %s208 = smul.u32 %s20, 2
        %s209 = sadd.s32 %s208, %s21
        %p210 = scmp.lt.s32.totalorder %s209, 3
        %s211 = scalar_select %p210, %s209, 3
        %s212 = smul.u32 8, %s211
        %s213 = ssub.s32 25, %s212
        %p214 = scmp.lt.s32.totalorder %s213, 8
        %s215 = scalar_select %p214, %s213, 8
        %s216 = smul.u32 128, %s215
        %p217 = scmp.lt.s32.totalorder %s212, 24
        %s218 = scalar_select %p217, %s212, 24
        %s219 = smul.addr %s218, 8
        %s220 = scalar_lea.vmem %s1, %s219
        %p221 = pneg %p91
        %p222 = pneg %p88
        %p223 = pneg %p117
        %p224 = pneg %p114
        %s225 = sand.u32 %s104, 1
        %s226 = scalar_lea.sflag [#allocation4], %s225
        %s227 = sand.u32 %s104, 1
        %s228 = smul.addr %s227, 8
        %s229 = scalar_lea.vmem [#allocation3], %s228
        %s230 = smul.u32 %s20, 2
        %s231 = sadd.s32 %s230, %s21
        %p232 = scmp.lt.s32.totalorder %s231, 3
        %s233 = scalar_select %p232, %s231, 3
        %s234 = smul.u32 8, %s233
        %s235 = ssub.s32 25, %s234
        %p236 = scmp.lt.s32.totalorder %s235, 8
        %s237 = scalar_select %p236, %s235, 8
        %s238 = smul.u32 64, %s237
        %p239 = scmp.lt.s32.totalorder %s234, 24
        %s240 = scalar_select %p239, %s234, 24
        %s241 = smul.addr %s240, 4
        %s242 = scalar_lea.vmem %s0, %s241
        %s243 = smul.u32 %s20, 2
        %s244 = sadd.s32 %s243, %s21
        %p245 = scmp.lt.s32.totalorder %s244, 3
        %s246 = scalar_select %p245, %s244, 3
        %s247 = smul.u32 8, %s246
        %s248 = ssub.s32 25, %s247
        %p249 = scmp.lt.s32.totalorder %s248, 8
        %s250 = scalar_select %p249, %s248, 8
        %s251 = smul.u32 64, %s250
        %s252 = smul.u32 %s20, 2
        %s253 = sadd.s32 %s252, %s21
        %p254 = scmp.lt.s32.totalorder %s253, 3
        %s255 = scalar_select %p254, %s253, 3
        %s256 = smul.u32 8, %s255
        %s257 = ssub.s32 25, %s256
        %p258 = scmp.lt.s32.totalorder %s257, 8
        %s259 = scalar_select %p258, %s257, 8
        %s260 = smul.u32 128, %s259
        %p261 = scmp.lt.s32.totalorder %s256, 24
        %s262 = scalar_select %p261, %s256, 24
        %s263 = smul.addr %s262, 8
        %s264 = scalar_lea.vmem %s1, %s263
        %s265 = smul.u32 %s20, 2
        %s266 = sadd.s32 %s265, %s21
        %p267 = scmp.lt.s32.totalorder %s266, 3
        %s268 = scalar_select %p267, %s266, 3
        %s269 = smul.u32 8, %s268
        %s270 = ssub.s32 25, %s269
        %p271 = scmp.lt.s32.totalorder %s270, 8
        %s272 = scalar_select %p271, %s270, 8
        %s273 = smul.u32 128, %s272
        %p274 = scmp.eq.s32.totalorder %s21, 0
        // Predicated region
        $region29: #{tpu_custom_call.1} parent=27 // pred_check
          %p275 = pneg %p274
        $region30: #{tpu_custom_call.1} parent=27 // pred_check_branch
          %277 = sbr.rel (%p275) target = $region32
        $region31: #{tpu_custom_call.1} parent=27 // pred_region
          %s278 = scalar_lea.smem [#allocation2], 0
          %279 = sst [smem:[%s278]] 0.0
        $region32: #{tpu_custom_call.1} parent=27 // pred_fallthru
          _
        %v280 = vld [vmem:[%s242] sm:$0xf]
        %v281 = vld [vmem:[%s242 + $0x4] sm:$0xf]
        %v282 = vld [vmem:[%s242 + $0x8] sm:$0xf]
        %v283 = vld [vmem:[%s242 + $0xc] sm:$0xf]
        %v284 = vld [vmem:[%s242 + $0x10] sm:$0xf]
        %v285 = vld [vmem:[%s242 + $0x14] sm:$0xf]
        %v286 = vld [vmem:[%s242 + $0x18] sm:$0xf]
        %v287 = vld [vmem:[%s242 + $0x1c] sm:$0xf]
        %v288 = vunpack.c.l.bf16 %v280
        %v289 = vunpack.c.l.bf16 %v281
        %v290 = vunpack.c.l.bf16 %v282
        %v291 = vunpack.c.l.bf16 %v283
        %v292 = vunpack.c.l.bf16 %v284
        %v293 = vunpack.c.l.bf16 %v285
        %v294 = vunpack.c.l.bf16 %v286
        %v295 = vunpack.c.l.bf16 %v287
        %v296 = vld [vmem:[%s264] sm:$0xff]
        %v297 = vld [vmem:[%s264 + $0x8] sm:$0xff]
        %v298 = vld [vmem:[%s264 + $0x10] sm:$0xff]
        %v299 = vld [vmem:[%s264 + $0x18] sm:$0xff]
        %v300 = vld [vmem:[%s264 + $0x20] sm:$0xff]
        %v301 = vld [vmem:[%s264 + $0x28] sm:$0xff]
        %v302 = vld [vmem:[%s264 + $0x30] sm:$0xff]
        %v303 = vld [vmem:[%s264 + $0x38] sm:$0xff]
        %s304 = smul.u32 %s20, 2
        %s305 = sadd.s32 %s304, %s21
        %s306 = smul.u32 %s305, 64
        %v307 = vlaneseq
        %v308 = vshrl.u32 %v307, 7
        %v309 = vadd.s32 %v308, 8
        %v310 = vadd.s32 %v308, 16
        %v311 = vadd.s32 %v308, 24
        %v312 = vadd.s32 %v308, 32
        %v313 = vadd.s32 %v308, 40
        %v314 = vadd.s32 %v308, 48
        %v315 = vadd.s32 %v308, 56
        %v316 = vstv %s306
        %v317 = vadd.s32 %v316, %v308
        %v318 = vadd.s32 %v316, %v309
        %v319 = vadd.s32 %v316, %v310
        %v320 = vadd.s32 %v316, %v311
        %v321 = vadd.s32 %v316, %v312
        %v322 = vadd.s32 %v316, %v313
        %v323 = vadd.s32 %v316, %v314
        %v324 = vadd.s32 %v316, %v315
        %vm325 = vcmp.lt.s32.totalorder %v317, 200
        %vm326 = vcmp.lt.s32.totalorder %v318, 200
        %vm327 = vcmp.lt.s32.totalorder %v319, 200
        %vm328 = vcmp.lt.s32.totalorder %v320, 200
        %vm329 = vcmp.lt.s32.totalorder %v321, 200
        %vm330 = vcmp.lt.s32.totalorder %v322, 200
        %vm331 = vcmp.lt.s32.totalorder %v323, 200
        %vm332 = vcmp.lt.s32.totalorder %v324, 200
        %vm333 = vcmask 80896
        %v334 = vsel %vm333, %v288, -inf
        %335 = vmax.xlane.f32.xlu0 %v334
        %v336 = vpop.xlane.xlu0 %335
        %v337 = vsel %vm333, %v289, -inf
        %338 = vmax.xlane.f32.xlu0 %v337
        %v339 = vpop.xlane.xlu0 %338
        %v340 = vsel %vm333, %v290, -inf
        %341 = vmax.xlane.f32.xlu0 %v340
        %v342 = vpop.xlane.xlu0 %341
        %v343 = vsel %vm333, %v291, -inf
        %344 = vmax.xlane.f32.xlu0 %v343
        %v345 = vpop.xlane.xlu0 %344
        %v346 = vsel %vm333, %v292, -inf
        %347 = vmax.xlane.f32.xlu0 %v346
        %v348 = vpop.xlane.xlu0 %347
        %v349 = vsel %vm333, %v293, -inf
        %350 = vmax.xlane.f32.xlu0 %v349
        %v351 = vpop.xlane.xlu0 %350
        %v352 = vsel %vm333, %v294, -inf
        %353 = vmax.xlane.f32.xlu0 %v352
        %v354 = vpop.xlane.xlu0 %353
        %v355 = vsel %vm333, %v295, -inf
        %356 = vmax.xlane.f32.xlu0 %v355
        %v357 = vpop.xlane.xlu0 %356
        %v358 = vsub.f32 %v288, %v336
        %v359 = vsub.f32 %v289, %v339
        %v360 = vsub.f32 %v290, %v342
        %v361 = vsub.f32 %v291, %v345
        %v362 = vsub.f32 %v292, %v348
        %v363 = vsub.f32 %v293, %v351
        %v364 = vsub.f32 %v294, %v354
        %v365 = vsub.f32 %v295, %v357
        %v366 = vmul.f32 %v358, 1.442695
        %v367 = vpow.pop %v366
        %v368 = vmul.f32 %v359, 1.442695
        %v369 = vpow.pop %v368
        %v370 = vmul.f32 %v360, 1.442695
        %v371 = vpow.pop %v370
        %v372 = vmul.f32 %v361, 1.442695
        %v373 = vpow.pop %v372
        %v374 = vmul.f32 %v362, 1.442695
        %v375 = vpow.pop %v374
        %v376 = vmul.f32 %v363, 1.442695
        %v377 = vpow.pop %v376
        %v378 = vmul.f32 %v364, 1.442695
        %v379 = vpow.pop %v378
        %v380 = vmul.f32 %v365, 1.442695
        %v381 = vpow.pop %v380
        %v382 = vsel %vm333, %v367, 0.0
        %383 = vadd.xlane.f32.xlu0 %v382
        %v384 = vpop.xlane.xlu0 %383
        %v385 = vsel %vm333, %v369, 0.0
        %386 = vadd.xlane.f32.xlu0 %v385
        %v387 = vpop.xlane.xlu0 %386
        %v388 = vsel %vm333, %v371, 0.0
        %389 = vadd.xlane.f32.xlu0 %v388
        %v390 = vpop.xlane.xlu0 %389
        %v391 = vsel %vm333, %v373, 0.0
        %392 = vadd.xlane.f32.xlu0 %v391
        %v393 = vpop.xlane.xlu0 %392
        %v394 = vsel %vm333, %v375, 0.0
        %395 = vadd.xlane.f32.xlu0 %v394
        %v396 = vpop.xlane.xlu0 %395
        %v397 = vsel %vm333, %v377, 0.0
        %398 = vadd.xlane.f32.xlu0 %v397
        %v399 = vpop.xlane.xlu0 %398
        %v400 = vsel %vm333, %v379, 0.0
        %401 = vadd.xlane.f32.xlu0 %v400
        %v402 = vpop.xlane.xlu0 %401
        %v403 = vsel %vm333, %v381, 0.0
        %404 = vadd.xlane.f32.xlu0 %v403
        %v405 = vpop.xlane.xlu0 %404
        %v406 = vlog2.pop %v384
        %v407 = vmul.f32 %v406, 0.6931472
        %v408 = vlog2.pop %v387
        %v409 = vmul.f32 %v408, 0.6931472
        %v410 = vlog2.pop %v390
        %v411 = vmul.f32 %v410, 0.6931472
        %v412 = vlog2.pop %v393
        %v413 = vmul.f32 %v412, 0.6931472
        %v414 = vlog2.pop %v396
        %v415 = vmul.f32 %v414, 0.6931472
        %v416 = vlog2.pop %v399
        %v417 = vmul.f32 %v416, 0.6931472
        %v418 = vlog2.pop %v402
        %v419 = vmul.f32 %v418, 0.6931472
        %v420 = vlog2.pop %v405
        %v421 = vmul.f32 %v420, 0.6931472
        %v422 = vrcp.pop %v384
        %v423 = vrcp.pop %v387
        %v424 = vrcp.pop %v390
        %v425 = vrcp.pop %v393
        %v426 = vrcp.pop %v396
        %v427 = vrcp.pop %v399
        %v428 = vrcp.pop %v402
        %v429 = vrcp.pop %v405
        %v430 = vmul.f32 %v384, %v422
        %v431 = vmul.f32 %v387, %v423
        %v432 = vmul.f32 %v390, %v424
        %v433 = vmul.f32 %v393, %v425
        %v434 = vmul.f32 %v396, %v426
        %v435 = vmul.f32 %v399, %v427
        %v436 = vmul.f32 %v402, %v428
        %v437 = vmul.f32 %v405, %v429
        %v438 = vsub.f32 2.0, %v430
        %v439 = vsub.f32 2.0, %v431
        %v440 = vsub.f32 2.0, %v432
        %v441 = vsub.f32 2.0, %v433
        %v442 = vsub.f32 2.0, %v434
        %v443 = vsub.f32 2.0, %v435
        %v444 = vsub.f32 2.0, %v436
        %v445 = vsub.f32 2.0, %v437
        %v446 = vmul.f32 %v422, %v438
        %v447 = vmul.f32 %v423, %v439
        %v448 = vmul.f32 %v424, %v440
        %v449 = vmul.f32 %v425, %v441
        %v450 = vmul.f32 %v426, %v442
        %v451 = vmul.f32 %v427, %v443
        %v452 = vmul.f32 %v428, %v444
        %v453 = vmul.f32 %v429, %v445
        %v454 = vmul.f32 %v367, %v446
        %v455 = vmul.f32 %v369, %v447
        %v456 = vmul.f32 %v371, %v448
        %v457 = vmul.f32 %v373, %v449
        %v458 = vmul.f32 %v375, %v450
        %v459 = vmul.f32 %v377, %v451
        %v460 = vmul.f32 %v379, %v452
        %v461 = vmul.f32 %v381, %v453
        %v462 = vmax.f32 %v454, 1e-07
        %v463 = vmax.f32 %v455, 1e-07
        %v464 = vmax.f32 %v456, 1e-07
        %v465 = vmax.f32 %v457, 1e-07
        %v466 = vmax.f32 %v458, 1e-07
        %v467 = vmax.f32 %v459, 1e-07
        %v468 = vmax.f32 %v460, 1e-07
        %v469 = vmax.f32 %v461, 1e-07
        %v470 = vsub.f32 %v358, %v407
        %v471 = vsub.f32 %v359, %v409
        %v472 = vsub.f32 %v360, %v411
        %v473 = vsub.f32 %v361, %v413
        %v474 = vsub.f32 %v362, %v415
        %v475 = vsub.f32 %v363, %v417
        %v476 = vsub.f32 %v364, %v419
        %v477 = vsub.f32 %v365, %v421
        %v478 = vmax.f32 %v470, -16.118095
        %v479 = vmax.f32 %v471, -16.118095
        %v480 = vmax.f32 %v472, -16.118095
        %v481 = vmax.f32 %v473, -16.118095
        %v482 = vmax.f32 %v474, -16.118095
        %v483 = vmax.f32 %v475, -16.118095
        %v484 = vmax.f32 %v476, -16.118095
        %v485 = vmax.f32 %v477, -16.118095
        %v486 = vlaneseq
        %v487 = vand.u32 %v486, 127
        %488 = vset.pattern.permute.xlu0 0
        %489 = vperm.xlu0 %488, %v296
        %v490 = vpop.permute.xlu0 %489
        %491 = vset.pattern.permute.xlu0 0
        %492 = vperm.xlu0 %491, %v297
        %v493 = vpop.permute.xlu0 %492
        %494 = vset.pattern.permute.xlu0 0
        %495 = vperm.xlu0 %494, %v298
        %v496 = vpop.permute.xlu0 %495
        %497 = vset.pattern.permute.xlu0 0
        %498 = vperm.xlu0 %497, %v299
        %v499 = vpop.permute.xlu0 %498
        %500 = vset.pattern.permute.xlu0 0
        %501 = vperm.xlu0 %500, %v300
        %v502 = vpop.permute.xlu0 %501
        %503 = vset.pattern.permute.xlu0 0
        %504 = vperm.xlu0 %503, %v301
        %v505 = vpop.permute.xlu0 %504
        %506 = vset.pattern.permute.xlu0 0
        %507 = vperm.xlu0 %506, %v302
        %v508 = vpop.permute.xlu0 %507
        %509 = vset.pattern.permute.xlu0 0
        %510 = vperm.xlu0 %509, %v303
        %v511 = vpop.permute.xlu0 %510
        %vm512 = vcmp.eq.s32.totalorder %v487, %v490
        %vm513 = vcmp.eq.s32.totalorder %v487, %v493
        %vm514 = vcmp.eq.s32.totalorder %v487, %v496
        %vm515 = vcmp.eq.s32.totalorder %v487, %v499
        %vm516 = vcmp.eq.s32.totalorder %v487, %v502
        %vm517 = vcmp.eq.s32.totalorder %v487, %v505
        %vm518 = vcmp.eq.s32.totalorder %v487, %v508
        %vm519 = vcmp.eq.s32.totalorder %v487, %v511
        %v520 = vsel %vm512, 1.0, 0.0001
        %v521 = vsel %vm513, 1.0, 0.0001
        %v522 = vsel %vm514, 1.0, 0.0001
        %v523 = vsel %vm515, 1.0, 0.0001
        %v524 = vsel %vm516, 1.0, 0.0001
        %v525 = vsel %vm517, 1.0, 0.0001
        %v526 = vsel %vm518, 1.0, 0.0001
        %v527 = vsel %vm519, 1.0, 0.0001
        %v528 = vmul.f32 %v478, %v520
        %v529 = vmul.f32 %v479, %v521
        %v530 = vmul.f32 %v480, %v522
        %v531 = vmul.f32 %v481, %v523
        %v532 = vmul.f32 %v482, %v524
        %v533 = vmul.f32 %v483, %v525
        %v534 = vmul.f32 %v484, %v526
        %v535 = vmul.f32 %v485, %v527
        %v536 = vsel %vm333, %v528, 0.0
        %537 = vadd.xlane.f32.xlu0 %v536
        %v538 = vpop.xlane.xlu0 %537
        %v539 = vsel %vm333, %v529, 0.0
        %540 = vadd.xlane.f32.xlu0 %v539
        %v541 = vpop.xlane.xlu0 %540
        %v542 = vsel %vm333, %v530, 0.0
        %543 = vadd.xlane.f32.xlu0 %v542
        %v544 = vpop.xlane.xlu0 %543
        %v545 = vsel %vm333, %v531, 0.0
        %546 = vadd.xlane.f32.xlu0 %v545
        %v547 = vpop.xlane.xlu0 %546
        %v548 = vsel %vm333, %v532, 0.0
        %549 = vadd.xlane.f32.xlu0 %v548
        %v550 = vpop.xlane.xlu0 %549
        %v551 = vsel %vm333, %v533, 0.0
        %552 = vadd.xlane.f32.xlu0 %v551
        %v553 = vpop.xlane.xlu0 %552
        %v554 = vsel %vm333, %v534, 0.0
        %555 = vadd.xlane.f32.xlu0 %v554
        %v556 = vpop.xlane.xlu0 %555
        %v557 = vsel %vm333, %v535, 0.0
        %558 = vadd.xlane.f32.xlu0 %v557
        %v559 = vpop.xlane.xlu0 %558
        %v560 = vsub.f32 0.0, %v538
        %v561 = vsub.f32 0.0, %v541
        %v562 = vsub.f32 0.0, %v544
        %v563 = vsub.f32 0.0, %v547
        %v564 = vsub.f32 0.0, %v550
        %v565 = vsub.f32 0.0, %v553
        %v566 = vsub.f32 0.0, %v556
        %v567 = vsub.f32 0.0, %v559
        %v568 = vsel %vm512, 0.0, %v462
        %v569 = vsel %vm513, 0.0, %v463
        %v570 = vsel %vm514, 0.0, %v464
        %v571 = vsel %vm515, 0.0, %v465
        %v572 = vsel %vm516, 0.0, %v466
        %v573 = vsel %vm517, 0.0, %v467
        %v574 = vsel %vm518, 0.0, %v468
        %v575 = vsel %vm519, 0.0, %v469
        %v576 = vsel %vm333, %v568, 0.0
        %577 = vadd.xlane.f32.xlu0 %v576
        %v578 = vpop.xlane.xlu0 %577
        %v579 = vsel %vm333, %v569, 0.0
        %580 = vadd.xlane.f32.xlu0 %v579
        %v581 = vpop.xlane.xlu0 %580
        %v582 = vsel %vm333, %v570, 0.0
        %583 = vadd.xlane.f32.xlu0 %v582
        %v584 = vpop.xlane.xlu0 %583
        %v585 = vsel %vm333, %v571, 0.0
        %586 = vadd.xlane.f32.xlu0 %v585
        %v587 = vpop.xlane.xlu0 %586
        %v588 = vsel %vm333, %v572, 0.0
        %589 = vadd.xlane.f32.xlu0 %v588
        %v590 = vpop.xlane.xlu0 %589
        %v591 = vsel %vm333, %v573, 0.0
        %592 = vadd.xlane.f32.xlu0 %v591
        %v593 = vpop.xlane.xlu0 %592
        %v594 = vsel %vm333, %v574, 0.0
        %595 = vadd.xlane.f32.xlu0 %v594
        %v596 = vpop.xlane.xlu0 %595
        %v597 = vsel %vm333, %v575, 0.0
        %598 = vadd.xlane.f32.xlu0 %v597
        %v599 = vpop.xlane.xlu0 %598
        %v600 = vmul.f32 %v578, 9.2103405
        %v601 = vmul.f32 %v581, 9.2103405
        %v602 = vmul.f32 %v584, 9.2103405
        %v603 = vmul.f32 %v587, 9.2103405
        %v604 = vmul.f32 %v590, 9.2103405
        %v605 = vmul.f32 %v593, 9.2103405
        %v606 = vmul.f32 %v596, 9.2103405
        %v607 = vmul.f32 %v599, 9.2103405
        %v608 = vmul.f32 %v560, 0.5
        %v609 = vmul.f32 %v561, 0.5
        %v610 = vmul.f32 %v562, 0.5
        %v611 = vmul.f32 %v563, 0.5
        %v612 = vmul.f32 %v564, 0.5
        %v613 = vmul.f32 %v565, 0.5
        %v614 = vmul.f32 %v566, 0.5
        %v615 = vmul.f32 %v567, 0.5
        %v616 = vadd.f32 %v608, %v600
        %v617 = vadd.f32 %v609, %v601
        %v618 = vadd.f32 %v610, %v602
        %v619 = vadd.f32 %v611, %v603
        %v620 = vadd.f32 %v612, %v604
        %v621 = vadd.f32 %v613, %v605
        %v622 = vadd.f32 %v614, %v606
        %v623 = vadd.f32 %v615, %v607
        %v624 = vsel %vm325, %v616, 0.0
        %v625 = vsel %vm326, %v617, 0.0
        %v626 = vsel %vm327, %v618, 0.0
        %v627 = vsel %vm328, %v619, 0.0
        %v628 = vsel %vm329, %v620, 0.0
        %v629 = vsel %vm330, %v621, 0.0
        %v630 = vsel %vm331, %v622, 0.0
        %v631 = vsel %vm332, %v623, 0.0
        %s632 = sld [smem:[#allocation2]]
        %vm633 = vcmask 7168
        %v634 = vsel %vm633, %v624, 0.0
        %v635 = vsel %vm633, %v625, 0.0
        %v636 = vadd.f32 %v634, %v635
        %v637 = vsel %vm633, %v626, 0.0
        %v638 = vadd.f32 %v636, %v637
        %v639 = vsel %vm633, %v627, 0.0
        %v640 = vadd.f32 %v638, %v639
        %v641 = vsel %vm633, %v628, 0.0
        %v642 = vadd.f32 %v640, %v641
        %v643 = vsel %vm633, %v629, 0.0
        %v644 = vadd.f32 %v642, %v643
        %v645 = vsel %vm633, %v630, 0.0
        %v646 = vadd.f32 %v644, %v645
        %v647 = vsel %vm633, %v631, 0.0
        %v648 = vadd.f32 %v646, %v647
        %649 = vadd.xlane.f32.xlu0 %v648
        %v650 = vpop.xlane.xlu0 %649
        %v651 = vrot.slane %v650, 4
        %v652 = vadd.f32 %v650, %v651
        %v653 = vrot.slane %v652, 2
        %v654 = vadd.f32 %v652, %v653
        %v655 = vrot.slane %v654, 1
        %v656 = vadd.f32 %v654, %v655
        %s657 = vtos %v656
        %s658 = sadd.f32 %s632, %s657
        %s659 = scalar_lea.smem [#allocation2], 0
        %660 = sst [smem:[%s659]] %s658
        %p661 = scmp.eq.s32.totalorder %s21, 1
        // Predicated region
        $region33: #{tpu_custom_call.1} parent=27 // pred_check
          %p662 = pneg %p661
        $region34: #{tpu_custom_call.1} parent=27 // pred_check_branch
          %664 = sbr.rel (%p662) target = $region36
        $region35: #{tpu_custom_call.1} parent=27 // pred_region
          %s665 = sld [smem:[#allocation2]]
          %v666 = vstv %s665
          %667 = vst [vmem:[%s229] sm:$0xff] %v666
        $region36: #{tpu_custom_call.1} parent=27 // pred_fallthru
          _
        %s668 = sand.u32 %s104, 1
        %s669 = scalar_lea.sflag [#allocation4], %s668
        %s670 = sand.u32 %s104, 1
        %s671 = smul.addr %s670, 8
        %s672 = scalar_lea.vmem [#allocation3], %s671
        // Predicated region
        $region37: #{tpu_custom_call.1} parent=27 // pred_check
          %p673 = pneg %p114
        $region38: #{tpu_custom_call.1} parent=27 // pred_check_branch
          %675 = sbr.rel (%p673) target = $region40
        $region39: #{tpu_custom_call.1} parent=27 // pred_region
          %s677 = ssub.s32 128, 128
          %678 = vsyncadd %s669, %s677
          %s679 = smul.addr %s20, 128
          %s680 = scalar_lea.hbm %s2, %s679
          %s682 = sshll.u32 %s672, 4
          %s683 = int_to_ptr.vmem [resolvable:$true] %s682
          %685 = dma.vmem_to_hbm [thread:$0]  %s683, 128, %s680, %s669
        $region40: #{tpu_custom_call.1} parent=27 // pred_fallthru
          _
      $region28: #{tpu_custom_call.1} parent=5 // pred_fallthru
        _
      %p686 = scmp.le.s32.totalorder 2, %s11
      // Predicated region
      $region41: #{tpu_custom_call.1} parent=5 // pred_check
        %p687 = pneg %p686
      $region42: #{tpu_custom_call.1} parent=5 // pred_check_branch
        %689 = sbr.rel (%p687) target = $region44
      $region43: #{tpu_custom_call.1} parent=5 // pred_region
        %s690 = ssub.s32 %s11, 2
        // Predicated region
        $region45: #{tpu_custom_call.1} parent=43 // pred_check
          %p691 = pneg %p120
        $region46: #{tpu_custom_call.1} parent=43 // pred_check_branch
          %693 = sbr.rel (%p691) target = $region48
        $region47: #{tpu_custom_call.1} parent=43 // pred_region
          %s694 = sand.u32 %s105, 1
          %s695 = scalar_lea.sflag [#allocation4], %s694
          %s696 = sand.u32 %s105, 1
          %s697 = smul.addr %s696, 8
          %s698 = scalar_lea.vmem [#allocation3], %s697
          %699 = dma.done %s695, 128
        $region48: #{tpu_custom_call.1} parent=43 // pred_fallthru
          _
      $region44: #{tpu_custom_call.1} parent=5 // pred_fallthru
        _
    $region6: #{tpu_custom_call.1} parent=1 // loop_footer
      %s15 = sadd.s32 1, %s11
    $region7: #{tpu_custom_call.1} parent=1 // loop_footer_branch
      %10 = sbr.rel target = $region3
    $region8: #{tpu_custom_call.1} parent=1 // loop_exit
      _
    %700 = vsyncpa [#allocation4], 1
    %s701 = scalar_lea.sflag [#allocation4], 1
    %702 = vsyncpa %s701, 1

</llo_original>
